<compile_context>
chip_gen: v5e
topology: v5e:2x2
jax: 0.10.0
libtpu: 0.0.40
codegen_flags: <defaults>
</compile_context>

<pallas_src>
import math
from functools import partial

import jax
import jax.numpy as jnp
from jax.experimental import pallas as pl
from jax.experimental.pallas import tpu as pltpu


def _round_up(n, m):
    return ((n + m - 1) // m) * m


# ---------------------------------------------------------------------------
# Kernel.  grid = (batch_tiles, k_tiles).  K (input features) is the inner,
# "arbitrary" reduction axis; acc_ref carries the fc1 pre-activation in f32
# across K steps.  Bias+ReLU+fc2 run once per batch tile, on the last K step.
# ---------------------------------------------------------------------------
def _mlp_kernel(x_ref, w1_ref, b1_ref, w2_ref, b2_ref, o_ref, acc_ref):
    k = pl.program_id(1)

    @pl.when(k == 0)
    def _init():
        acc_ref[...] = jnp.zeros_like(acc_ref)

    # fc1 partial product: (TB, TK) @ (TK, Hp), bf16 MXU, f32 accumulation.
    acc_ref[...] += jnp.dot(x_ref[...], w1_ref[...],
                            preferred_element_type=jnp.float32)

    @pl.when(k == pl.num_programs(1) - 1)
    def _finalize():
        # Bias + ReLU in f32 on the VPU (v5e-safe), then fc2 on the MXU.
        h = jnp.maximum(acc_ref[...] + b1_ref[...], 0.0)
        o = jnp.dot(h.astype(w2_ref.dtype), w2_ref[...],
                    preferred_element_type=jnp.float32)
        o_ref[...] = (o + b2_ref[...]).astype(o_ref.dtype)


# ---------------------------------------------------------------------------
# One-time parameter preparation (pad to lane-dense multiples of 128 + cast
# matmul operands to bf16).  Keep biases in f32.
# ---------------------------------------------------------------------------
def prepare_params(w1, b1, w2, b2, compute_dtype=jnp.bfloat16):
    input_dim, hidden_dim = w1.shape
    output_dim = w2.shape[1]
    D_pad = _round_up(input_dim, 128)
    H_pad = _round_up(hidden_dim, 128)
    O_pad = _round_up(output_dim, 128)

    w1p = jnp.pad(w1, ((0, D_pad - input_dim),
                       (0, H_pad - hidden_dim))).astype(compute_dtype)
    b1p = jnp.pad(b1, (0, H_pad - hidden_dim)).reshape(1, H_pad).astype(jnp.float32)
    w2p = jnp.pad(w2, ((0, H_pad - hidden_dim),
                       (0, O_pad - output_dim))).astype(compute_dtype)
    b2p = jnp.pad(b2, (0, O_pad - output_dim)).reshape(1, O_pad).astype(jnp.float32)
    return w1p, b1p, w2p, b2p


def _vmem_caps():
    """Returns (tile-selection budget, Mosaic scoped-VMEM limit) in bytes."""
    try:
        cap = int(pltpu.get_tpu_info().vmem_capacity_bytes)
        cap = max(32 * 1024 * 1024, min(cap, 128 * 1024 * 1024))
    except Exception:
        cap = 64 * 1024 * 1024   # conservative default: v7x has 64 MiB / core
    return (cap * 3) // 4, (cap * 7) // 8


def _choose_tiling(B8, D_pad, H_pad, O_pad, budget):
    """Pick (TB, TK): batch tile rows and K (input-feature) tile width."""

    def vmem_bytes(tb, tk):
        return (2 * tb * tk * 2           # x tile      (bf16, double-buffered)
                + 2 * tk * H_pad * 2      # W1 block    (bf16, counted 2x: be honest
                                          #   about default double-buffering even
                                          #   for constant-index blocks)
                + 2 * H_pad * 4           # b1          (f32)
                + 2 * H_pad * O_pad * 2   # W2          (bf16)
                + 2 * O_pad * 4           # b2          (f32)
                + 2 * tb * O_pad * 4      # out tile    (f32, double-buffered)
                + tb * H_pad * 4)         # f32 accumulator scratch

    tb = min(512, B8)
    tk = D_pad
    # Prefer keeping the batch tile >= 128 rows and splitting K instead of
    # shrinking to overhead-dominated tiny tiles.
    while tb > 128 and vmem_bytes(tb, tk) > budget:
        tb = _round_up(tb // 2, 8)
    if vmem_bytes(tb, tk) > budget:
        m = D_pad // 128
        for nk in range(1, m + 1):
            if m % nk == 0 and vmem_bytes(tb, D_pad // nk) <= budget:
                tk = D_pad // nk
                break
        else:
            tk = 128
    while tb > 8 and vmem_bytes(tb, tk) > budget:
        tb = _round_up(tb // 2, 8)
    return tb, tk


@partial(jax.jit, static_argnames=("output_dim",))
def attentive_mlp_forward(x_nchw, w1p, b1p, w2p, b2p, *, output_dim):
    """x_nchw: (B, C, H, W).  w1p/b1p/w2p/b2p from prepare_params()."""
    B = x_nchw.shape[0]
    D_pad, H_pad = w1p.shape
    O_pad = w2p.shape[1]
    cdtype = w1p.dtype

    # Flatten NCHW -> (B, D), matching torch's x.view(x.size(0), -1).
    x2d = x_nchw.reshape(B, -1).astype(cdtype)
    in_feats = x2d.shape[1]
    assert in_feats <= D_pad and output_dim <= O_pad

    budget, vmem_limit = _vmem_caps()
    B8 = _round_up(B, 8)
    TB, TK = _choose_tiling(B8, D_pad, H_pad, O_pad, budget)

    # Re-balance batch tiles: avoid a mostly-padding last tile, and give v7x's
    # two TensorCores at least one tile each whenever the batch allows it.
    num_tiles = pl.cdiv(B8, TB)
    if num_tiles < 2 and B8 >= 16:
        num_tiles = 2
    TB = _round_up(pl.cdiv(B8, num_tiles), 8)
    B_pad = num_tiles * TB
    num_k = D_pad // TK

    if (B_pad, D_pad) != x2d.shape:
        # TODO(synk): handle the batch remainder with a ragged/masked last
        # tile instead of a wrapper-side pad (extra HBM round trip over x).
        x2d = jnp.pad(x2d, ((0, B_pad - B), (0, D_pad - in_feats)))

    w1_bytes = w1p.size * w1p.dtype.itemsize * (num_tiles if num_k > 1 else 1)
    cost = pl.CostEstimate(
        flops=int(2 * B_pad * (D_pad * H_pad + H_pad * O_pad)),
        transcendentals=0,
        bytes_accessed=int(x2d.size * x2d.dtype.itemsize + w1_bytes
                           + w2p.size * w2p.dtype.itemsize
                           + b1p.size * 4 + b2p.size * 4
                           + B_pad * O_pad * 4),
    )

    out = pl.pallas_call(
        _mlp_kernel,
        out_shape=jax.ShapeDtypeStruct((B_pad, O_pad), jnp.float32),
        grid_spec=pltpu.PrefetchScalarGridSpec(
            num_scalar_prefetch=0,
            grid=(num_tiles, num_k),
            in_specs=[
                pl.BlockSpec((TB, TK), lambda i, k: (i, k)),        # x tile
                pl.BlockSpec((TK, H_pad), lambda i, k: (k, 0)),     # W1 (resident when num_k == 1)
                pl.BlockSpec((1, H_pad), lambda i, k: (0, 0)),      # b1
                pl.BlockSpec((H_pad, O_pad), lambda i, k: (0, 0)),  # W2 (resident)
                pl.BlockSpec((1, O_pad), lambda i, k: (0, 0)),      # b2
            ],
            out_specs=pl.BlockSpec((TB, O_pad), lambda i, k: (i, 0)),
            scratch_shapes=[pltpu.VMEM((TB, H_pad), jnp.float32)],
        ),
        compiler_params=pltpu.CompilerParams(
            # TODO(synk): sweep pltpu.CORE_PARALLEL on axis 0 for v7x.
            dimension_semantics=("parallel", "arbitrary"),
            vmem_limit_bytes=int(vmem_limit),
        ),
        cost_estimate=cost,
    )(x2d, w1p, b1p, w2p, b2p)

    return out[:B, :output_dim]


def init_params(key, input_dim, hidden_dim, output_dim):
    """Deterministic init mimicking nn.Linear default (uniform +/- 1/sqrt(fan_in))."""
    k1, k2, k3, k4 = jax.random.split(key, 4)
    lim1 = 1.0 / math.sqrt(input_dim)
    lim2 = 1.0 / math.sqrt(hidden_dim)
    # Stored already-transposed relative to PyTorch: (in_dim, out_dim)
    w1 = jax.random.uniform(k1, (input_dim, hidden_dim), jnp.float32, -lim1, lim1)
    b1 = jax.random.uniform(k2, (hidden_dim,), jnp.float32, -lim1, lim1)
    w2 = jax.random.uniform(k3, (hidden_dim, output_dim), jnp.float32, -lim2, lim2)
    b2 = jax.random.uniform(k4, (output_dim,), jnp.float32, -lim2, lim2)
    return w1, b1, w2, b2


if __name__ == "__main__":
    # Small shapes consistent with forward(): x is NCHW, flattened inside.
    B, C, H, W = 2, 4, 16, 16
    input_dim = C * H * W          # 1024
    hidden_dim = 32
    output_dim = 8
    # lambda_reg only affects regularization_loss (not forward); unused here.
    # TODO(synk): regularization_loss / AttentionModule are not part of
    # forward() and are not implemented.

    key = jax.random.PRNGKey(0)
    kx, kp = jax.random.split(key)
    x = jax.random.normal(kx, (B, C, H, W), jnp.float32)
    w1, b1, w2, b2 = init_params(kp, input_dim, hidden_dim, output_dim)

    params = prepare_params(w1, b1, w2, b2)      # pad + bf16-cast ONCE
    out = attentive_mlp_forward(x, *params, output_dim=output_dim)
    out = jax.block_until_ready(out)

    # Reference check in plain JAX (f32).  Matmul inputs are bf16 in the
    # kernel (f32 accumulation), so use a correspondingly loose tolerance.
    x2d = x.reshape(B, -1)
    ref = jnp.maximum(x2d @ w1 + b1, 0.0) @ w2 + b2
    assert out.shape == (B, output_dim)
    assert jnp.allclose(out, ref, atol=5e-2, rtol=5e-2), "mismatch vs reference"

    print("KERNEL_OK")
</pallas_src>

<mosaic_0001>
module attributes {stable_mosaic.version = 11 : i64} {
  func.func @_mlp_kernel(%arg0: i32, %arg1: i32, %arg2: memref<8x1024xbf16, #tpu.memory_space<vmem>>, %arg3: memref<1024x128xbf16, #tpu.memory_space<vmem>>, %arg4: memref<1x128xf32, #tpu.memory_space<vmem>>, %arg5: memref<128x128xbf16, #tpu.memory_space<vmem>>, %arg6: memref<1x128xf32, #tpu.memory_space<vmem>>, %arg7: memref<8x128xf32, #tpu.memory_space<vmem>>, %arg8: memref<8x128xf32, #tpu.memory_space<vmem>>) attributes {dimension_semantics = [#tpu.dimension_semantics<parallel>, #tpu.dimension_semantics<arbitrary>], iteration_bounds = array<i64: 1, 1>, scalar_prefetch = 0 : i64, scratch_operands = 1 : i64, tpu.core_type = #tpu.core_type<tc>, window_params = [{transform_indices = @transform_0, window_bounds = array<i64: 8, 1024>}, {transform_indices = @transform_1, window_bounds = array<i64: 1024, 128>}, {pipeline_mode = #tpu.pipeline_mode<synchronous>, transform_indices = @transform_2, window_bounds = array<i64: 1, 128>}, {pipeline_mode = #tpu.pipeline_mode<synchronous>, transform_indices = @transform_3, window_bounds = array<i64: 128, 128>}, {pipeline_mode = #tpu.pipeline_mode<synchronous>, transform_indices = @transform_4, window_bounds = array<i64: 1, 128>}, {transform_indices = @transform_5, window_bounds = array<i64: 8, 128>}]} {
    %c0_i32 = arith.constant 0 : i32
    %0 = arith.cmpi eq, %arg1, %c0_i32 : i32
    %1 = arith.extui %0 : i1 to i32
    %c0_i32_0 = arith.constant 0 : i32
    %2 = arith.cmpi ne, %1, %c0_i32_0 : i32
    scf.if %2 {
      %cst_10 = arith.constant 0.000000e+00 : f32
      %12 = vector.broadcast %cst_10 : f32 to vector<8x128xf32>
      %c0_11 = arith.constant 0 : index
      %c0_12 = arith.constant 0 : index
      %13 = vector.load %arg8[%c0_11, %c0_12] : memref<8x128xf32, #tpu.memory_space<vmem>>, vector<8x128xf32>
      tpu.vector_store %arg8[%c0_11, %c0_12], %12 {strides = array<i32>} : memref<8x128xf32, #tpu.memory_space<vmem>>, vector<8x128xf32>,
    } else {
    }
    %c0 = arith.constant 0 : index
    %c0_1 = arith.constant 0 : index
    %3 = vector.load %arg8[%c0, %c0_1] : memref<8x128xf32, #tpu.memory_space<vmem>>, vector<8x128xf32>
    %c0_2 = arith.constant 0 : index
    %c0_3 = arith.constant 0 : index
    %4 = vector.load %arg2[%c0_2, %c0_3] : memref<8x1024xbf16, #tpu.memory_space<vmem>>, vector<8x1024xbf16>
    %c0_4 = arith.constant 0 : index
    %c0_5 = arith.constant 0 : index
    %5 = vector.load %arg3[%c0_4, %c0_5] : memref<1024x128xbf16, #tpu.memory_space<vmem>>, vector<1024x128xbf16>
    %cst = arith.constant dense<0.000000e+00> : vector<8x128xf32>
    %6 = tpu.matmul %4, %5, %cst {dimension_numbers = #tpu.dot_dimension_numbers<[1], [0], [0], [1], [0, 0, 1, 1], [], []>} : vector<8x1024xbf16>, vector<1024x128xbf16>, vector<8x128xf32> -> vector<8x128xf32>
    %7 = arith.addf %3, %6 : vector<8x128xf32>
    %c0_6 = arith.constant 0 : index
    %c0_7 = arith.constant 0 : index
    %8 = vector.load %arg8[%c0_6, %c0_7] : memref<8x128xf32, #tpu.memory_space<vmem>>, vector<8x128xf32>
    tpu.vector_store %arg8[%c0_6, %c0_7], %7 {strides = array<i32>} : memref<8x128xf32, #tpu.memory_space<vmem>>, vector<8x128xf32>,
    %c0_i32_8 = arith.constant 0 : i32
    %9 = arith.cmpi eq, %arg1, %c0_i32_8 : i32
    %10 = arith.extui %9 : i1 to i32
    %c0_i32_9 = arith.constant 0 : i32
    %11 = arith.cmpi ne, %10, %c0_i32_9 : i32
    scf.if %11 {
      %c0_10 = arith.constant 0 : index
      %c0_11 = arith.constant 0 : index
      %12 = vector.load %arg8[%c0_10, %c0_11] : memref<8x128xf32, #tpu.memory_space<vmem>>, vector<8x128xf32>
      %c0_12 = arith.constant 0 : index
      %c0_13 = arith.constant 0 : index
      %13 = vector.load %arg4[%c0_12, %c0_13] : memref<1x128xf32, #tpu.memory_space<vmem>>, vector<1x128xf32>
      %14 = vector.broadcast %13 : vector<1x128xf32> to vector<8x128xf32>
      %15 = arith.addf %12, %14 : vector<8x128xf32>
      %cst_14 = arith.constant 0.000000e+00 : f32
      %16 = vector.broadcast %cst_14 : f32 to vector<8x128xf32>
      %17 = arith.maximumf %15, %16 : vector<8x128xf32>
      %18 = arith.truncf %17 : vector<8x128xf32> to vector<8x128xbf16>
      %c0_15 = arith.constant 0 : index
      %c0_16 = arith.constant 0 : index
      %19 = vector.load %arg5[%c0_15, %c0_16] : memref<128x128xbf16, #tpu.memory_space<vmem>>, vector<128x128xbf16>
      %cst_17 = arith.constant dense<0.000000e+00> : vector<8x128xf32>
      %20 = tpu.matmul %18, %19, %cst_17 {dimension_numbers = #tpu.dot_dimension_numbers<[1], [0], [0], [1], [0, 0, 1, 1], [], []>} : vector<8x128xbf16>, vector<128x128xbf16>, vector<8x128xf32> -> vector<8x128xf32>
      %c0_18 = arith.constant 0 : index
      %c0_19 = arith.constant 0 : index
      %21 = vector.load %arg6[%c0_18, %c0_19] : memref<1x128xf32, #tpu.memory_space<vmem>>, vector<1x128xf32>
      %22 = vector.broadcast %21 : vector<1x128xf32> to vector<8x128xf32>
      %23 = arith.addf %20, %22 : vector<8x128xf32>
      %c0_20 = arith.constant 0 : index
      %c0_21 = arith.constant 0 : index
      %24 = vector.load %arg7[%c0_20, %c0_21] : memref<8x128xf32, #tpu.memory_space<vmem>>, vector<8x128xf32>
      tpu.vector_store %arg7[%c0_20, %c0_21], %23 {strides = array<i32>} : memref<8x128xf32, #tpu.memory_space<vmem>>, vector<8x128xf32>,
    } else {
    }
    return
  }
  func.func @transform_0(%arg0: i32, %arg1: i32) -> (i32, i32) {
    %c0_i32 = arith.constant 0 : i32
    return %arg0, %arg1 : i32, i32
  }
  func.func @transform_1(%arg0: i32, %arg1: i32) -> (i32, i32) {
    %c0_i32 = arith.constant 0 : i32
    %c0_i32_0 = arith.constant 0 : i32
    return %arg1, %c0_i32 : i32, i32
  }
  func.func @transform_2(%arg0: i32, %arg1: i32) -> (i32, i32) {
    %c0_i32 = arith.constant 0 : i32
    %c0_i32_0 = arith.constant 0 : i32
    %c0_i32_1 = arith.constant 0 : i32
    return %c0_i32, %c0_i32_0 : i32, i32
  }
  func.func @transform_3(%arg0: i32, %arg1: i32) -> (i32, i32) {
    %c0_i32 = arith.constant 0 : i32
    %c0_i32_0 = arith.constant 0 : i32
    %c0_i32_1 = arith.constant 0 : i32
    return %c0_i32, %c0_i32_0 : i32, i32
  }
  func.func @transform_4(%arg0: i32, %arg1: i32) -> (i32, i32) {
    %c0_i32 = arith.constant 0 : i32
    %c0_i32_0 = arith.constant 0 : i32
    %c0_i32_1 = arith.constant 0 : i32
    return %c0_i32, %c0_i32_0 : i32, i32
  }
  func.func @transform_5(%arg0: i32, %arg1: i32) -> (i32, i32) {
    %c0_i32 = arith.constant 0 : i32
    %c0_i32_0 = arith.constant 0 : i32
    return %arg0, %c0_i32 : i32, i32
  }
}

</mosaic_0001>

<llo_original>
// kernel: attentive_mlp_forward.1
$region0: #{attentive_mlp_forward.1}
  #allocation0 [shape = 'u32[]', space=smem, size = 0x4, offset = 0x4, fixed_abs, tag = 'smem constant byte address 0x4 - core index']
  #allocation1 [shape = 'u32[72,128]{1,0:T(1,128)}', space=vmem, size = 0x9000, scoped, tag = 'internal scratch']
  #allocation2 [shape = 'f32[8,128]{1,0:T(8,128)}', space=vmem, size = 0x1000, scoped, tag = 'scratch operand']
  %s0 = inlined_call_operand.vmem [shape: bf16[8,1024], index: 0, kind: input, shape index: {}]
  %s1 = inlined_call_operand.hbm [shape: bf16[1024,128], index: 1, kind: input, shape index: {}]
  %s2 = inlined_call_operand.vmem [shape: f32[1,128], index: 2, kind: input, shape index: {}]
  %s3 = inlined_call_operand.vmem [shape: bf16[128,128], index: 3, kind: input, shape index: {}]
  %s4 = inlined_call_operand.vmem [shape: f32[1,128], index: 4, kind: input, shape index: {}]
  %s5 = inlined_call_operand.vmem [shape: f32[8,128], index: 5, kind: output, shape index: {}]
  %s6 = sld [smem:[#allocation0]]
  $region42: #{attentive_mlp_forward.1} parent=0
    _
  %s8 = ssub.s32 1, %s6
  %s9 = scalar_select 0, %s8, %s6
  $region1: #{attentive_mlp_forward.1} parent=0
    #allocation3 [shape = 'u8[262144]{0}', space=vmem, size = 0x40000, scoped, tag = 'input window, operand 1, single buffered']
    #allocation4 [shape = 's32[1]{0}', space=sflag, size = 0x4, scoped, tag = 'scoped memory for attentive_mlp_forward.1']
    %10 = vsyncpa [#allocation4], 0
    // Predicated region
    $region2: #{attentive_mlp_forward.1} parent=1 // pred_check
      _
    $region3: #{attentive_mlp_forward.1} parent=1 // pred_check_branch
      %12 = sbr.rel (0) target = $region5
    $region4: #{attentive_mlp_forward.1} parent=1 // pred_region
      _
    $region5: #{attentive_mlp_forward.1} parent=1 // pred_fallthru
      _
    // Predicated region
    $region6: #{attentive_mlp_forward.1} parent=1 // pred_check
      _
    $region7: #{attentive_mlp_forward.1} parent=1 // pred_check_branch
      %14 = sbr.rel (0) target = $region9
    $region8: #{attentive_mlp_forward.1} parent=1 // pred_region
      %16 = vsyncadd [#allocation4], 0
      %s17 = sshll.u32 %s1, 4
      %s18 = int_to_ptr.hbm [resolvable:$true] %s17
      %s19 = sshll.u32 [#allocation3], 4
      %s20 = int_to_ptr.vmem [resolvable:$true] %s19
      %25 = dma.hbm_to_vmem [thread:$0]  %s18, 8192, %s20, [#allocation4], 64, 64, 4
    $region9: #{attentive_mlp_forward.1} parent=1 // pred_fallthru
      _
    // Predicated region
    $region10: #{attentive_mlp_forward.1} parent=1 // pred_check
      _
    $region11: #{attentive_mlp_forward.1} parent=1 // pred_check_branch
      %27 = sbr.rel (0) target = $region13
    $region12: #{attentive_mlp_forward.1} parent=1 // pred_region
      _
    $region13: #{attentive_mlp_forward.1} parent=1 // pred_fallthru
      _
    // Predicated region
    $region14: #{attentive_mlp_forward.1} parent=1 // pred_check
      _
    $region15: #{attentive_mlp_forward.1} parent=1 // pred_check_branch
      %29 = sbr.rel (0) target = $region17
    $region16: #{attentive_mlp_forward.1} parent=1 // pred_region
      _
    $region17: #{attentive_mlp_forward.1} parent=1 // pred_fallthru
      _
    // Predicated region
    $region18: #{attentive_mlp_forward.1} parent=1 // pred_check
      _
    $region19: #{attentive_mlp_forward.1} parent=1 // pred_check_branch
      %31 = sbr.rel (0) target = $region21
    $region20: #{attentive_mlp_forward.1} parent=1 // pred_region
      _
    $region21: #{attentive_mlp_forward.1} parent=1 // pred_fallthru
      _
    // Predicated region
    $region22: #{attentive_mlp_forward.1} parent=1 // pred_check
      _
    $region23: #{attentive_mlp_forward.1} parent=1 // pred_check_branch
      %33 = sbr.rel (0) target = $region25
    $region24: #{attentive_mlp_forward.1} parent=1 // pred_region
      %35 = dma.done [#allocation4], 8192
    $region25: #{attentive_mlp_forward.1} parent=1 // pred_fallthru
      _
    %p36 = scmp.eq.s32.totalorder 0, 0
    // Predicated region
    $region26: #{attentive_mlp_forward.1} parent=1 // pred_check
      %p37 = pneg %p36
    $region27: #{attentive_mlp_forward.1} parent=1 // pred_check_branch
      %39 = sbr.rel (%p37) target = $region29
    $region28: #{attentive_mlp_forward.1} parent=1 // pred_region
      %40 = vst [vmem:[#allocation2] sm:$0xff] 0.0
    $region29: #{attentive_mlp_forward.1} parent=1 // pred_fallthru
      _
    %v41 = vld [vmem:[#allocation2] sm:$0xff]
    %v42 = vld [vmem:[%s0] sm:$0xff]
    %v43 = vld [vmem:[%s0 + $0x8] sm:$0xff]
    %v44 = vld [vmem:[%s0 + $0x10] sm:$0xff]
    %v45 = vld [vmem:[%s0 + $0x18] sm:$0xff]
    %v46 = vld [vmem:[#allocation3] sm:$0xf]
    %v47 = vld [vmem:[#allocation3 + $0x4] sm:$0xf]
    %v48 = vld [vmem:[#allocation3 + $0x8] sm:$0xf]
    %v49 = vld [vmem:[#allocation3 + $0xc] sm:$0xf]
    %v50 = vld [vmem:[#allocation3 + $0x10] sm:$0xf]
    %v51 = vld [vmem:[#allocation3 + $0x14] sm:$0xf]
    %v52 = vld [vmem:[#allocation3 + $0x18] sm:$0xf]
    %v53 = vld [vmem:[#allocation3 + $0x1c] sm:$0xf]
    %v54 = vld [vmem:[#allocation3 + $0x20] sm:$0xf]
    %v55 = vld [vmem:[#allocation3 + $0x24] sm:$0xf]
    %v56 = vld [vmem:[#allocation3 + $0x28] sm:$0xf]
    %v57 = vld [vmem:[#allocation3 + $0x2c] sm:$0xf]
    %v58 = vld [vmem:[#allocation3 + $0x30] sm:$0xf]
    %v59 = vld [vmem:[#allocation3 + $0x34] sm:$0xf]
    %v60 = vld [vmem:[#allocation3 + $0x38] sm:$0xf]
    %v61 = vld [vmem:[#allocation3 + $0x3c] sm:$0xf]
    %v62 = vld [vmem:[#allocation3 + $0x40] sm:$0xf]
    %v63 = vld [vmem:[#allocation3 + $0x44] sm:$0xf]
    %v64 = vld [vmem:[#allocation3 + $0x48] sm:$0xf]
    %v65 = vld [vmem:[#allocation3 + $0x4c] sm:$0xf]
    %v66 = vld [vmem:[#allocation3 + $0x50] sm:$0xf]
    %v67 = vld [vmem:[#allocation3 + $0x54] sm:$0xf]
    %v68 = vld [vmem:[#allocation3 + $0x58] sm:$0xf]
    %v69 = vld [vmem:[#allocation3 + $0x5c] sm:$0xf]
    %v70 = vld [vmem:[#allocation3 + $0x60] sm:$0xf]
    %v71 = vld [vmem:[#allocation3 + $0x64] sm:$0xf]
    %v72 = vld [vmem:[#allocation3 + $0x68] sm:$0xf]
    %v73 = vld [vmem:[#allocation3 + $0x6c] sm:$0xf]
    %v74 = vld [vmem:[#allocation3 + $0x70] sm:$0xf]
    %v75 = vld [vmem:[#allocation3 + $0x74] sm:$0xf]
    %v76 = vld [vmem:[#allocation3 + $0x78] sm:$0xf]
    %v77 = vld [vmem:[#allocation3 + $0x7c] sm:$0xf]
    %v78 = vld [vmem:[#allocation3 + $0x80] sm:$0xf]
    %v79 = vld [vmem:[#allocation3 + $0x84] sm:$0xf]
    %v80 = vld [vmem:[#allocation3 + $0x88] sm:$0xf]
    %v81 = vld [vmem:[#allocation3 + $0x8c] sm:$0xf]
    %v82 = vld [vmem:[#allocation3 + $0x90] sm:$0xf]
    %v83 = vld [vmem:[#allocation3 + $0x94] sm:$0xf]
    %v84 = vld [vmem:[#allocation3 + $0x98] sm:$0xf]
    %v85 = vld [vmem:[#allocation3 + $0x9c] sm:$0xf]
    %v86 = vld [vmem:[#allocation3 + $0xa0] sm:$0xf]
    %v87 = vld [vmem:[#allocation3 + $0xa4] sm:$0xf]
    %v88 = vld [vmem:[#allocation3 + $0xa8] sm:$0xf]
    %v89 = vld [vmem:[#allocation3 + $0xac] sm:$0xf]
    %v90 = vld [vmem:[#allocation3 + $0xb0] sm:$0xf]
    %v91 = vld [vmem:[#allocation3 + $0xb4] sm:$0xf]
    %v92 = vld [vmem:[#allocation3 + $0xb8] sm:$0xf]
    %v93 = vld [vmem:[#allocation3 + $0xbc] sm:$0xf]
    %v94 = vld [vmem:[#allocation3 + $0xc0] sm:$0xf]
    %v95 = vld [vmem:[#allocation3 + $0xc4] sm:$0xf]
    %v96 = vld [vmem:[#allocation3 + $0xc8] sm:$0xf]
    %v97 = vld [vmem:[#allocation3 + $0xcc] sm:$0xf]
    %v98 = vld [vmem:[#allocation3 + $0xd0] sm:$0xf]
    %v99 = vld [vmem:[#allocation3 + $0xd4] sm:$0xf]
    %v100 = vld [vmem:[#allocation3 + $0xd8] sm:$0xf]
    %v101 = vld [vmem:[#allocation3 + $0xdc] sm:$0xf]
    %v102 = vld [vmem:[#allocation3 + $0xe0] sm:$0xf]
    %v103 = vld [vmem:[#allocation3 + $0xe4] sm:$0xf]
    %v104 = vld [vmem:[#allocation3 + $0xe8] sm:$0xf]
    %v105 = vld [vmem:[#allocation3 + $0xec] sm:$0xf]
    %v106 = vld [vmem:[#allocation3 + $0xf0] sm:$0xf]
    %v107 = vld [vmem:[#allocation3 + $0xf4] sm:$0xf]
    %v108 = vld [vmem:[#allocation3 + $0xf8] sm:$0xf]
    %v109 = vld [vmem:[#allocation3 + $0xfc] sm:$0xf]
    %v110 = vld [vmem:[#allocation3 + $0x100] sm:$0xf]
    %v111 = vld [vmem:[#allocation3 + $0x104] sm:$0xf]
    %v112 = vld [vmem:[#allocation3 + $0x108] sm:$0xf]
    %v113 = vld [vmem:[#allocation3 + $0x10c] sm:$0xf]
    %v114 = vld [vmem:[#allocation3 + $0x110] sm:$0xf]
    %v115 = vld [vmem:[#allocation3 + $0x114] sm:$0xf]
    %v116 = vld [vmem:[#allocation3 + $0x118] sm:$0xf]
    %v117 = vld [vmem:[#allocation3 + $0x11c] sm:$0xf]
    %v118 = vld [vmem:[#allocation3 + $0x120] sm:$0xf]
    %v119 = vld [vmem:[#allocation3 + $0x124] sm:$0xf]
    %v120 = vld [vmem:[#allocation3 + $0x128] sm:$0xf]
    %v121 = vld [vmem:[#allocation3 + $0x12c] sm:$0xf]
    %v122 = vld [vmem:[#allocation3 + $0x130] sm:$0xf]
    %v123 = vld [vmem:[#allocation3 + $0x134] sm:$0xf]
    %v124 = vld [vmem:[#allocation3 + $0x138] sm:$0xf]
    %v125 = vld [vmem:[#allocation3 + $0x13c] sm:$0xf]
    %v126 = vld [vmem:[#allocation3 + $0x140] sm:$0xf]
    %v127 = vld [vmem:[#allocation3 + $0x144] sm:$0xf]
    %v128 = vld [vmem:[#allocation3 + $0x148] sm:$0xf]
    %v129 = vld [vmem:[#allocation3 + $0x14c] sm:$0xf]
    %v130 = vld [vmem:[#allocation3 + $0x150] sm:$0xf]
    %v131 = vld [vmem:[#allocation3 + $0x154] sm:$0xf]
    %v132 = vld [vmem:[#allocation3 + $0x158] sm:$0xf]
    %v133 = vld [vmem:[#allocation3 + $0x15c] sm:$0xf]
    %v134 = vld [vmem:[#allocation3 + $0x160] sm:$0xf]
    %v135 = vld [vmem:[#allocation3 + $0x164] sm:$0xf]
    %v136 = vld [vmem:[#allocation3 + $0x168] sm:$0xf]
    %v137 = vld [vmem:[#allocation3 + $0x16c] sm:$0xf]
    %v138 = vld [vmem:[#allocation3 + $0x170] sm:$0xf]
    %v139 = vld [vmem:[#allocation3 + $0x174] sm:$0xf]
    %v140 = vld [vmem:[#allocation3 + $0x178] sm:$0xf]
    %v141 = vld [vmem:[#allocation3 + $0x17c] sm:$0xf]
    %v142 = vld [vmem:[#allocation3 + $0x180] sm:$0xf]
    %v143 = vld [vmem:[#allocation3 + $0x184] sm:$0xf]
    %v144 = vld [vmem:[#allocation3 + $0x188] sm:$0xf]
    %v145 = vld [vmem:[#allocation3 + $0x18c] sm:$0xf]
    %v146 = vld [vmem:[#allocation3 + $0x190] sm:$0xf]
    %v147 = vld [vmem:[#allocation3 + $0x194] sm:$0xf]
    %v148 = vld [vmem:[#allocation3 + $0x198] sm:$0xf]
    %v149 = vld [vmem:[#allocation3 + $0x19c] sm:$0xf]
    %v150 = vld [vmem:[#allocation3 + $0x1a0] sm:$0xf]
    %v151 = vld [vmem:[#allocation3 + $0x1a4] sm:$0xf]
    %v152 = vld [vmem:[#allocation3 + $0x1a8] sm:$0xf]
    %v153 = vld [vmem:[#allocation3 + $0x1ac] sm:$0xf]
    %v154 = vld [vmem:[#allocation3 + $0x1b0] sm:$0xf]
    %v155 = vld [vmem:[#allocation3 + $0x1b4] sm:$0xf]
    %v156 = vld [vmem:[#allocation3 + $0x1b8] sm:$0xf]
    %v157 = vld [vmem:[#allocation3 + $0x1bc] sm:$0xf]
    %v158 = vld [vmem:[#allocation3 + $0x1c0] sm:$0xf]
    %v159 = vld [vmem:[#allocation3 + $0x1c4] sm:$0xf]
    %v160 = vld [vmem:[#allocation3 + $0x1c8] sm:$0xf]
    %v161 = vld [vmem:[#allocation3 + $0x1cc] sm:$0xf]
    %v162 = vld [vmem:[#allocation3 + $0x1d0] sm:$0xf]
    %v163 = vld [vmem:[#allocation3 + $0x1d4] sm:$0xf]
    %v164 = vld [vmem:[#allocation3 + $0x1d8] sm:$0xf]
    %v165 = vld [vmem:[#allocation3 + $0x1dc] sm:$0xf]
    %v166 = vld [vmem:[#allocation3 + $0x1e0] sm:$0xf]
    %v167 = vld [vmem:[#allocation3 + $0x1e4] sm:$0xf]
    %v168 = vld [vmem:[#allocation3 + $0x1e8] sm:$0xf]
    %v169 = vld [vmem:[#allocation3 + $0x1ec] sm:$0xf]
    %v170 = vld [vmem:[#allocation3 + $0x1f0] sm:$0xf]
    %v171 = vld [vmem:[#allocation3 + $0x1f4] sm:$0xf]
    %v172 = vld [vmem:[#allocation3 + $0x1f8] sm:$0xf]
    %v173 = vld [vmem:[#allocation3 + $0x1fc] sm:$0xf]
    %v178 = vunpack.c.l.b16 %v42
    %v179 = vunpack.c.h.b16 %v42
    %v180 = vunpack.c.l.b16 %v43
    %v181 = vunpack.c.h.b16 %v43
    %v182 = vunpack.c.l.b16 %v44
    %v183 = vunpack.c.h.b16 %v44
    %v184 = vunpack.c.l.b16 %v45
    %v185 = vunpack.c.h.b16 %v45
    %v186 = vpack.c.b16 %v178, %v178
    %v187 = vpack.c.b16 %v179, %v179
    %v188 = vpack.c.b16 %v180, %v180
    %v189 = vpack.c.b16 %v181, %v181
    %v190 = vpack.c.b16 %v182, %v182
    %v191 = vpack.c.b16 %v183, %v183
    %v192 = vpack.c.b16 %v184, %v184
    %v193 = vpack.c.b16 %v185, %v185
    %v330 = vunpack.c.l.b16 %v46
    %v331 = vunpack.c.l.b16 %v47
    %v332 = vunpack.c.l.b16 %v48
    %v333 = vunpack.c.l.b16 %v49
    %v334 = vunpack.c.l.b16 %v50
    %v335 = vunpack.c.l.b16 %v51
    %v336 = vunpack.c.l.b16 %v52
    %v337 = vunpack.c.l.b16 %v53
    %v338 = vunpack.c.l.b16 %v54
    %v339 = vunpack.c.l.b16 %v55
    %v340 = vunpack.c.l.b16 %v56
    %v341 = vunpack.c.l.b16 %v57
    %v342 = vunpack.c.l.b16 %v58
    %v343 = vunpack.c.l.b16 %v59
    %v344 = vunpack.c.l.b16 %v60
    %v345 = vunpack.c.l.b16 %v61
    %v346 = vunpack.c.l.b16 %v62
    %v347 = vunpack.c.l.b16 %v63
    %v348 = vunpack.c.l.b16 %v64
    %v349 = vunpack.c.l.b16 %v65
    %v350 = vunpack.c.l.b16 %v66
    %v351 = vunpack.c.l.b16 %v67
    %v352 = vunpack.c.l.b16 %v68
    %v353 = vunpack.c.l.b16 %v69
    %v354 = vunpack.c.l.b16 %v70
    %v355 = vunpack.c.l.b16 %v71
    %v356 = vunpack.c.l.b16 %v72
    %v357 = vunpack.c.l.b16 %v73
    %v358 = vunpack.c.l.b16 %v74
    %v359 = vunpack.c.l.b16 %v75
    %v360 = vunpack.c.l.b16 %v76
    %v361 = vunpack.c.l.b16 %v77
    %v362 = vunpack.c.l.b16 %v78
    %v363 = vunpack.c.l.b16 %v79
    %v364 = vunpack.c.l.b16 %v80
    %v365 = vunpack.c.l.b16 %v81
    %v366 = vunpack.c.l.b16 %v82
    %v367 = vunpack.c.l.b16 %v83
    %v368 = vunpack.c.l.b16 %v84
    %v369 = vunpack.c.l.b16 %v85
    %v370 = vunpack.c.l.b16 %v86
    %v371 = vunpack.c.l.b16 %v87
    %v372 = vunpack.c.l.b16 %v88
    %v373 = vunpack.c.l.b16 %v89
    %v374 = vunpack.c.l.b16 %v90
    %v375 = vunpack.c.l.b16 %v91
    %v376 = vunpack.c.l.b16 %v92
    %v377 = vunpack.c.l.b16 %v93
    %v378 = vunpack.c.l.b16 %v94
    %v379 = vunpack.c.l.b16 %v95
    %v380 = vunpack.c.l.b16 %v96
    %v381 = vunpack.c.l.b16 %v97
    %v382 = vunpack.c.l.b16 %v98
    %v383 = vunpack.c.l.b16 %v99
    %v384 = vunpack.c.l.b16 %v100
    %v385 = vunpack.c.l.b16 %v101
    %v386 = vunpack.c.l.b16 %v102
    %v387 = vunpack.c.l.b16 %v103
    %v388 = vunpack.c.l.b16 %v104
    %v389 = vunpack.c.l.b16 %v105
    %v390 = vunpack.c.l.b16 %v106
    %v391 = vunpack.c.l.b16 %v107
    %v392 = vunpack.c.l.b16 %v108
    %v393 = vunpack.c.l.b16 %v109
    %v394 = vunpack.c.l.b16 %v110
    %v395 = vunpack.c.l.b16 %v111
    %v396 = vunpack.c.l.b16 %v112
    %v397 = vunpack.c.l.b16 %v113
    %v398 = vunpack.c.l.b16 %v114
    %v399 = vunpack.c.l.b16 %v115
    %v400 = vunpack.c.l.b16 %v116
    %v401 = vunpack.c.l.b16 %v117
    %v402 = vunpack.c.l.b16 %v118
    %v403 = vunpack.c.l.b16 %v119
    %v404 = vunpack.c.l.b16 %v120
    %v405 = vunpack.c.l.b16 %v121
    %v406 = vunpack.c.l.b16 %v122
    %v407 = vunpack.c.l.b16 %v123
    %v408 = vunpack.c.l.b16 %v124
    %v409 = vunpack.c.l.b16 %v125
    %v410 = vunpack.c.l.b16 %v126
    %v411 = vunpack.c.l.b16 %v127
    %v412 = vunpack.c.l.b16 %v128
    %v413 = vunpack.c.l.b16 %v129
    %v414 = vunpack.c.l.b16 %v130
    %v415 = vunpack.c.l.b16 %v131
    %v416 = vunpack.c.l.b16 %v132
    %v417 = vunpack.c.l.b16 %v133
    %v418 = vunpack.c.l.b16 %v134
    %v419 = vunpack.c.l.b16 %v135
    %v420 = vunpack.c.l.b16 %v136
    %v421 = vunpack.c.l.b16 %v137
    %v422 = vunpack.c.l.b16 %v138
    %v423 = vunpack.c.l.b16 %v139
    %v424 = vunpack.c.l.b16 %v140
    %v425 = vunpack.c.l.b16 %v141
    %v426 = vunpack.c.l.b16 %v142
    %v427 = vunpack.c.l.b16 %v143
    %v428 = vunpack.c.l.b16 %v144
    %v429 = vunpack.c.l.b16 %v145
    %v430 = vunpack.c.l.b16 %v146
    %v431 = vunpack.c.l.b16 %v147
    %v432 = vunpack.c.l.b16 %v148
    %v433 = vunpack.c.l.b16 %v149
    %v434 = vunpack.c.l.b16 %v150
    %v435 = vunpack.c.l.b16 %v151
    %v436 = vunpack.c.l.b16 %v152
    %v437 = vunpack.c.l.b16 %v153
    %v438 = vunpack.c.l.b16 %v154
    %v439 = vunpack.c.l.b16 %v155
    %v440 = vunpack.c.l.b16 %v156
    %v441 = vunpack.c.l.b16 %v157
    %v442 = vunpack.c.l.b16 %v158
    %v443 = vunpack.c.l.b16 %v159
    %v444 = vunpack.c.l.b16 %v160
    %v445 = vunpack.c.l.b16 %v161
    %v446 = vunpack.c.l.b16 %v162
    %v447 = vunpack.c.l.b16 %v163
    %v448 = vunpack.c.l.b16 %v164
    %v449 = vunpack.c.l.b16 %v165
    %v450 = vunpack.c.l.b16 %v166
    %v451 = vunpack.c.l.b16 %v167
    %v452 = vunpack.c.l.b16 %v168
    %v453 = vunpack.c.l.b16 %v169
    %v454 = vunpack.c.l.b16 %v170
    %v455 = vunpack.c.l.b16 %v171
    %v456 = vunpack.c.l.b16 %v172
    %v457 = vunpack.c.l.b16 %v173
    %v458 = vpack.c.b16 %v331, %v330
    %v459 = vpack.c.b16 %v333, %v332
    %v460 = vpack.c.b16 %v335, %v334
    %v461 = vpack.c.b16 %v337, %v336
    %v462 = vpack.c.b16 %v339, %v338
    %v463 = vpack.c.b16 %v341, %v340
    %v464 = vpack.c.b16 %v343, %v342
    %v465 = vpack.c.b16 %v345, %v344
    %v466 = vpack.c.b16 %v347, %v346
    %v467 = vpack.c.b16 %v349, %v348
    %v468 = vpack.c.b16 %v351, %v350
    %v469 = vpack.c.b16 %v353, %v352
    %v470 = vpack.c.b16 %v355, %v354
    %v471 = vpack.c.b16 %v357, %v356
    %v472 = vpack.c.b16 %v359, %v358
    %v473 = vpack.c.b16 %v361, %v360
    %v474 = vpack.c.b16 %v363, %v362
    %v475 = vpack.c.b16 %v365, %v364
    %v476 = vpack.c.b16 %v367, %v366
    %v477 = vpack.c.b16 %v369, %v368
    %v478 = vpack.c.b16 %v371, %v370
    %v479 = vpack.c.b16 %v373, %v372
    %v480 = vpack.c.b16 %v375, %v374
    %v481 = vpack.c.b16 %v377, %v376
    %v482 = vpack.c.b16 %v379, %v378
    %v483 = vpack.c.b16 %v381, %v380
    %v484 = vpack.c.b16 %v383, %v382
    %v485 = vpack.c.b16 %v385, %v384
    %v486 = vpack.c.b16 %v387, %v386
    %v487 = vpack.c.b16 %v389, %v388
    %v488 = vpack.c.b16 %v391, %v390
    %v489 = vpack.c.b16 %v393, %v392
    %v490 = vpack.c.b16 %v395, %v394
    %v491 = vpack.c.b16 %v397, %v396
    %v492 = vpack.c.b16 %v399, %v398
    %v493 = vpack.c.b16 %v401, %v400
    %v494 = vpack.c.b16 %v403, %v402
    %v495 = vpack.c.b16 %v405, %v404
    %v496 = vpack.c.b16 %v407, %v406
    %v497 = vpack.c.b16 %v409, %v408
    %v498 = vpack.c.b16 %v411, %v410
    %v499 = vpack.c.b16 %v413, %v412
    %v500 = vpack.c.b16 %v415, %v414
    %v501 = vpack.c.b16 %v417, %v416
    %v502 = vpack.c.b16 %v419, %v418
    %v503 = vpack.c.b16 %v421, %v420
    %v504 = vpack.c.b16 %v423, %v422
    %v505 = vpack.c.b16 %v425, %v424
    %v506 = vpack.c.b16 %v427, %v426
    %v507 = vpack.c.b16 %v429, %v428
    %v508 = vpack.c.b16 %v431, %v430
    %v509 = vpack.c.b16 %v433, %v432
    %v510 = vpack.c.b16 %v435, %v434
    %v511 = vpack.c.b16 %v437, %v436
    %v512 = vpack.c.b16 %v439, %v438
    %v513 = vpack.c.b16 %v441, %v440
    %v514 = vpack.c.b16 %v443, %v442
    %v515 = vpack.c.b16 %v445, %v444
    %v516 = vpack.c.b16 %v447, %v446
    %v517 = vpack.c.b16 %v449, %v448
    %v518 = vpack.c.b16 %v451, %v450
    %v519 = vpack.c.b16 %v453, %v452
    %v520 = vpack.c.b16 %v455, %v454
    %v521 = vpack.c.b16 %v457, %v456
    %586 = vmatpush.bf16.msra.mxu0 %v465
    %587 = vmatpush.bf16.msra.mxu0 %v464
    %588 = vmatpush.bf16.msra.mxu0 %v463
    %589 = vmatpush.bf16.msra.mxu0 %v462
    %590 = vmatpush.bf16.msra.mxu0 %v461
    %591 = vmatpush.bf16.msra.mxu0 %v460
    %592 = vmatpush.bf16.msra.mxu0 %v459
    %593 = vmatpush.bf16.msra.mxu0 %v458
    %594 = vmatmul.bf16.gmra.mxu0 %v186
    %v595 = vpop.f32.mrf.mxu0
    %v596 = vadd.f32 0.0, %v595
    %v597 = vpop.f32.mrf.mxu0
    %598 = vdwg.mxu0
    %599 = vmatpush.bf16.msra.mxu0 %v473
    %600 = vmatpush.bf16.msra.mxu0 %v472
    %601 = vmatpush.bf16.msra.mxu0 %v471
    %602 = vmatpush.bf16.msra.mxu0 %v470
    %603 = vmatpush.bf16.msra.mxu0 %v469
    %604 = vmatpush.bf16.msra.mxu0 %v468
    %605 = vmatpush.bf16.msra.mxu0 %v467
    %606 = vmatpush.bf16.msra.mxu0 %v466
    %607 = vmatmul.bf16.gmra.mxu0 %v187
    %v608 = vpop.f32.mrf.mxu0
    %v609 = vadd.f32 %v596, %v608
    %v610 = vpop.f32.mrf.mxu0
    %611 = vdwg.mxu0
    %612 = vmatpush.bf16.msra.mxu0 %v481
    %613 = vmatpush.bf16.msra.mxu0 %v480
    %614 = vmatpush.bf16.msra.mxu0 %v479
    %615 = vmatpush.bf16.msra.mxu0 %v478
    %616 = vmatpush.bf16.msra.mxu0 %v477
    %617 = vmatpush.bf16.msra.mxu0 %v476
    %618 = vmatpush.bf16.msra.mxu0 %v475
    %619 = vmatpush.bf16.msra.mxu0 %v474
    %620 = vmatmul.bf16.gmra.mxu0 %v188
    %v621 = vpop.f32.mrf.mxu0
    %v622 = vadd.f32 %v609, %v621
    %v623 = vpop.f32.mrf.mxu0
    %624 = vdwg.mxu0
    %625 = vmatpush.bf16.msra.mxu0 %v489
    %626 = vmatpush.bf16.msra.mxu0 %v488
    %627 = vmatpush.bf16.msra.mxu0 %v487
    %628 = vmatpush.bf16.msra.mxu0 %v486
    %629 = vmatpush.bf16.msra.mxu0 %v485
    %630 = vmatpush.bf16.msra.mxu0 %v484
    %631 = vmatpush.bf16.msra.mxu0 %v483
    %632 = vmatpush.bf16.msra.mxu0 %v482
    %633 = vmatmul.bf16.gmra.mxu0 %v189
    %v634 = vpop.f32.mrf.mxu0
    %v635 = vadd.f32 %v622, %v634
    %v636 = vpop.f32.mrf.mxu0
    %637 = vdwg.mxu0
    %638 = vmatpush.bf16.msra.mxu0 %v497
    %639 = vmatpush.bf16.msra.mxu0 %v496
    %640 = vmatpush.bf16.msra.mxu0 %v495
    %641 = vmatpush.bf16.msra.mxu0 %v494
    %642 = vmatpush.bf16.msra.mxu0 %v493
    %643 = vmatpush.bf16.msra.mxu0 %v492
    %644 = vmatpush.bf16.msra.mxu0 %v491
    %645 = vmatpush.bf16.msra.mxu0 %v490
    %646 = vmatmul.bf16.gmra.mxu0 %v190
    %v647 = vpop.f32.mrf.mxu0
    %v648 = vadd.f32 %v635, %v647
    %v649 = vpop.f32.mrf.mxu0
    %650 = vdwg.mxu0
    %651 = vmatpush.bf16.msra.mxu0 %v505
    %652 = vmatpush.bf16.msra.mxu0 %v504
    %653 = vmatpush.bf16.msra.mxu0 %v503
    %654 = vmatpush.bf16.msra.mxu0 %v502
    %655 = vmatpush.bf16.msra.mxu0 %v501
    %656 = vmatpush.bf16.msra.mxu0 %v500
    %657 = vmatpush.bf16.msra.mxu0 %v499
    %658 = vmatpush.bf16.msra.mxu0 %v498
    %659 = vmatmul.bf16.gmra.mxu0 %v191
    %v660 = vpop.f32.mrf.mxu0
    %v661 = vadd.f32 %v648, %v660
    %v662 = vpop.f32.mrf.mxu0
    %663 = vdwg.mxu0
    %664 = vmatpush.bf16.msra.mxu0 %v513
    %665 = vmatpush.bf16.msra.mxu0 %v512
    %666 = vmatpush.bf16.msra.mxu0 %v511
    %667 = vmatpush.bf16.msra.mxu0 %v510
    %668 = vmatpush.bf16.msra.mxu0 %v509
    %669 = vmatpush.bf16.msra.mxu0 %v508
    %670 = vmatpush.bf16.msra.mxu0 %v507
    %671 = vmatpush.bf16.msra.mxu0 %v506
    %672 = vmatmul.bf16.gmra.mxu0 %v192
    %v673 = vpop.f32.mrf.mxu0
    %v674 = vadd.f32 %v661, %v673
    %v675 = vpop.f32.mrf.mxu0
    %676 = vdwg.mxu0
    %677 = vmatpush.bf16.msra.mxu0 %v521
    %678 = vmatpush.bf16.msra.mxu0 %v520
    %679 = vmatpush.bf16.msra.mxu0 %v519
    %680 = vmatpush.bf16.msra.mxu0 %v518
    %681 = vmatpush.bf16.msra.mxu0 %v517
    %682 = vmatpush.bf16.msra.mxu0 %v516
    %683 = vmatpush.bf16.msra.mxu0 %v515
    %684 = vmatpush.bf16.msra.mxu0 %v514
    %685 = vmatmul.bf16.gmra.mxu0 %v193
    %v686 = vpop.f32.mrf.mxu0
    %v687 = vadd.f32 %v674, %v686
    %v688 = vpop.f32.mrf.mxu0
    %689 = vdwg.mxu0
    %v690 = vadd.f32 %v41, %v687
    %691 = vst [vmem:[#allocation2] sm:$0xff] %v690
    // Predicated region
    $region30: #{attentive_mlp_forward.1} parent=1 // pred_check
      %p692 = pneg %p36
    $region31: #{attentive_mlp_forward.1} parent=1 // pred_check_branch
      %694 = sbr.rel (%p692) target = $region33
    $region32: #{attentive_mlp_forward.1} parent=1 // pred_region
      %v695 = vld [vmem:[#allocation2] sm:$0xff]
      %v696 = vld [vmem:[%s2] sm:$0x1]
      %v698 = vperm.slane %v696, 0
      %v700 = vadd.f32 %v695, %v698
      %v701 = vmax.f32 %v700, 0.0
      %v702 = vpack.c.bf16 %v701, %v701
      %v703 = vld [vmem:[%s3] sm:$0xf]
      %v704 = vld [vmem:[%s3 + $0x4] sm:$0xf]
      %v705 = vld [vmem:[%s3 + $0x8] sm:$0xf]
      %v706 = vld [vmem:[%s3 + $0xc] sm:$0xf]
      %v707 = vld [vmem:[%s3 + $0x10] sm:$0xf]
      %v708 = vld [vmem:[%s3 + $0x14] sm:$0xf]
      %v709 = vld [vmem:[%s3 + $0x18] sm:$0xf]
      %v710 = vld [vmem:[%s3 + $0x1c] sm:$0xf]
      %v711 = vld [vmem:[%s3 + $0x20] sm:$0xf]
      %v712 = vld [vmem:[%s3 + $0x24] sm:$0xf]
      %v713 = vld [vmem:[%s3 + $0x28] sm:$0xf]
      %v714 = vld [vmem:[%s3 + $0x2c] sm:$0xf]
      %v715 = vld [vmem:[%s3 + $0x30] sm:$0xf]
      %v716 = vld [vmem:[%s3 + $0x34] sm:$0xf]
      %v717 = vld [vmem:[%s3 + $0x38] sm:$0xf]
      %v718 = vld [vmem:[%s3 + $0x3c] sm:$0xf]
      %v719 = vld [vmem:[%s4] sm:$0x1]
      %v721 = vperm.slane %v719, 0
      %v739 = vunpack.c.l.b16 %v703
      %v740 = vunpack.c.l.b16 %v704
      %v741 = vunpack.c.l.b16 %v705
      %v742 = vunpack.c.l.b16 %v706
      %v743 = vunpack.c.l.b16 %v707
      %v744 = vunpack.c.l.b16 %v708
      %v745 = vunpack.c.l.b16 %v709
      %v746 = vunpack.c.l.b16 %v710
      %v747 = vunpack.c.l.b16 %v711
      %v748 = vunpack.c.l.b16 %v712
      %v749 = vunpack.c.l.b16 %v713
      %v750 = vunpack.c.l.b16 %v714
      %v751 = vunpack.c.l.b16 %v715
      %v752 = vunpack.c.l.b16 %v716
      %v753 = vunpack.c.l.b16 %v717
      %v754 = vunpack.c.l.b16 %v718
      %v755 = vpack.c.b16 %v740, %v739
      %v756 = vpack.c.b16 %v742, %v741
      %v757 = vpack.c.b16 %v744, %v743
      %v758 = vpack.c.b16 %v746, %v745
      %v759 = vpack.c.b16 %v748, %v747
      %v760 = vpack.c.b16 %v750, %v749
      %v761 = vpack.c.b16 %v752, %v751
      %v762 = vpack.c.b16 %v754, %v753
      %771 = vmatpush.bf16.msra.mxu0 %v762
      %772 = vmatpush.bf16.msra.mxu0 %v761
      %773 = vmatpush.bf16.msra.mxu0 %v760
      %774 = vmatpush.bf16.msra.mxu0 %v759
      %775 = vmatpush.bf16.msra.mxu0 %v758
      %776 = vmatpush.bf16.msra.mxu0 %v757
      %777 = vmatpush.bf16.msra.mxu0 %v756
      %778 = vmatpush.bf16.msra.mxu0 %v755
      %779 = vmatmul.bf16.gmra.mxu0 %v702
      %v780 = vpop.f32.mrf.mxu0
      %v781 = vadd.f32 %v721, %v780
      %v782 = vpop.f32.mrf.mxu0
      %783 = vdwg.mxu0
      %784 = vst [vmem:[%s5] sm:$0xff] %v781
    $region33: #{attentive_mlp_forward.1} parent=1 // pred_fallthru
      _
    // Predicated region
    $region34: #{attentive_mlp_forward.1} parent=1 // pred_check
      _
    $region35: #{attentive_mlp_forward.1} parent=1 // pred_check_branch
      %786 = sbr.rel (0) target = $region37
    $region36: #{attentive_mlp_forward.1} parent=1 // pred_region
      _
    $region37: #{attentive_mlp_forward.1} parent=1 // pred_fallthru
      _
    // Predicated region
    $region38: #{attentive_mlp_forward.1} parent=1 // pred_check
      _
    $region39: #{attentive_mlp_forward.1} parent=1 // pred_check_branch
      %788 = sbr.rel (0) target = $region41
    $region40: #{attentive_mlp_forward.1} parent=1 // pred_region
      _
    $region41: #{attentive_mlp_forward.1} parent=1 // pred_fallthru
      _
    %789 = vsyncpa [#allocation4], 1

</llo_original>
